<compile_context>
chip_gen: v7x
topology: tpu7x:2x2x1
jax: 0.10.0
libtpu: 0.0.40
codegen_flags: <defaults>
</compile_context>

<pallas_src>
import functools

import jax
import jax.numpy as jnp
from jax.experimental import pallas as pl
from jax.experimental.pallas import tpu as pltpu

HIDDEN = 256   # fixed by the module (hidden_layer_size = 256)


def _pg_forward_kernel(x_ref, w1_ref, b1_ref, w2_ref, b2_ref,
                       actor_ref, critic_ref):
    """Fused actor+critic forward for one batch tile.

    x      : [TB, S]   input (cast to the MXU compute dtype in-kernel)
    w1     : [S, 2H]   actor-layer-1 | critic-layer-1 fused on N (compute dtype)
    b1     : [1, 2H]   f32 (bias + ReLU run on the f32 VPU path)
    w2     : [H, A]    actor layer 2 (compute dtype)
    b2     : [1, A]    f32
    actor  : [TB, A]
    critic : [TB, H]
    """
    x = x_ref[...].astype(w1_ref.dtype)   # bf16 MXU operands when requested

    # Critic half: matmul -> bias -> ReLU written straight to its output ref.
    # No [TB, 2H] temp round-trip through VMEM (v5e has one vst slot); the
    # N=256 column slices of w1/b1 are 128-lane aligned, i.e. free views.
    hc = jnp.dot(x, w1_ref[:, HIDDEN:], preferred_element_type=jnp.float32)
    critic_ref[...] = jnp.maximum(hc + b1_ref[:, HIDDEN:], 0.0).astype(
        critic_ref.dtype)

    # Actor half: layer-1 -> ReLU -> layer-2 head.  Output block is (TB, A)
    # unpadded: at the HBM roofline the 16x smaller writeback beats the
    # lane-dense-store micro-win.
    ha = jnp.dot(x, w1_ref[:, :HIDDEN], preferred_element_type=jnp.float32)
    ha = jnp.maximum(ha + b1_ref[:, :HIDDEN], 0.0)
    act = jnp.dot(ha.astype(w2_ref.dtype), w2_ref[...],
                  preferred_element_type=jnp.float32)
    actor_ref[...] = (act + b2_ref[...]).astype(actor_ref.dtype)


def prepare_params(params, *, compute_dtype=jnp.float32):
    """One-time layout plumbing: call at init / after each optimizer update,
    NOT per forward.  Fuses the two layer-1 weights on the N axis and casts
    the matmul operands to the MXU compute dtype.  Biases stay f32."""
    w1a, b1a, w2a, b2a, w1c, b1c = params
    w1 = jnp.concatenate([w1a, w1c], axis=1).astype(compute_dtype)   # [S, 2H]
    b1 = jnp.concatenate([b1a, b1c], axis=1).astype(jnp.float32)     # [1, 2H]
    w2 = w2a.astype(compute_dtype)                                   # [H, A]
    b2 = b2a.astype(jnp.float32)                                     # [1, A]
    return w1, b1, w2, b2


@functools.lru_cache(maxsize=1)
def _vmem_limit_bytes():
    # 3/4 of physical VMEM, capped at 96 MiB: ~48 MiB on v7x (64 MiB per TC),
    # 96 MiB on v5e/v6e (128 MiB).  Per-generation tuning without branching.
    try:
        cap = pltpu.get_tpu_info().vmem_capacity_bytes
    except Exception:
        cap = 64 * 1024 * 1024
    return int(min(96 * 1024 * 1024, (cap * 3) // 4))


def policy_gradient_forward(x, fused_params, *, batch_tile=4096,
                            out_dtype=jnp.float32):
    """Runs the Pallas kernel.

    x: [B, state_size]; fused_params: output of `prepare_params`.
    Returns (actor_logits [B, action_size], critic_hidden [B, 256]) in
    `out_dtype` (use bf16 if downstream tolerates it: halves HBM writeback).
    """
    w1, b1, w2, b2 = fused_params
    B, S = x.shape
    H2 = w1.shape[1]
    H = H2 // 2
    A = w2.shape[1]

    # --- batch tiling: fit the tile to B so the last tile isn't mostly
    # padding, rounded up to a sublane multiple (8). ------------------------
    nb_target = pl.cdiv(B, batch_tile)
    TB = ((pl.cdiv(B, nb_target) + 7) // 8) * 8
    nb = pl.cdiv(B, TB)
    Bp = nb * TB
    xp = x if Bp == B else jnp.pad(x, ((0, Bp - B), (0, 0)))

    # Advisory cost for XLA's scheduler around this custom call.
    x_isz = jnp.dtype(x.dtype).itemsize
    w_isz = jnp.dtype(w1.dtype).itemsize
    o_isz = jnp.dtype(out_dtype).itemsize
    flops = 2 * Bp * S * H2 + 2 * Bp * H * A
    bytes_accessed = (Bp * S * x_isz
                      + (S * H2 + H * A) * w_isz + (H2 + A) * 4
                      + Bp * (A + H) * o_isz)

    def resident(shape):
        # Constant index_map: block is DMA'd once and stays VMEM-resident
        # across the batch grid (Pallas skips re-fetch for repeated indices).
        return pl.BlockSpec(shape, lambda i: (0,) * len(shape))

    # TODO(synk): on v7x, confirm in the profile that the batch grid shards
    # across both TensorCores; if one TC is idle switch dimension_semantics
    # to pltpu.CORE_PARALLEL.
    actor_p, critic_p = pl.pallas_call(
        _pg_forward_kernel,
        out_shape=(
            jax.ShapeDtypeStruct((Bp, A), out_dtype),   # unpadded actor logits
            jax.ShapeDtypeStruct((Bp, H), out_dtype),
        ),
        grid=(nb,),
        in_specs=[
            pl.BlockSpec((TB, S), lambda i: (i, 0)),    # x, tiled over batch
            resident((S, H2)),                          # fused layer-1 W
            resident((1, H2)),                          # fused layer-1 b
            resident((H, A)),                           # actor layer-2 W
            resident((1, A)),                           # actor layer-2 b
        ],
        out_specs=(
            pl.BlockSpec((TB, A), lambda i: (i, 0)),    # actor
            pl.BlockSpec((TB, H), lambda i: (i, 0)),    # critic
        ),
        compiler_params=pltpu.CompilerParams(
            dimension_semantics=("parallel",),          # megacore-shardable
            vmem_limit_bytes=_vmem_limit_bytes(),
        ),
        cost_estimate=pl.CostEstimate(
            flops=int(flops), transcendentals=0,
            bytes_accessed=int(bytes_accessed)),
    )(xp, w1, b1, w2, b2)

    # Padded batch rows hold ReLU(b1) garbage -- always slice before use.
    return actor_p[:B], critic_p[:B]


def init_params(key, state_size, action_size, hidden=HIDDEN):
    """Deterministic parameter init (Kaiming-uniform-ish, like nn.Linear)."""
    k = jax.random.split(key, 6)

    def lin(kw, kb, fan_in, fan_out):
        bound = 1.0 / jnp.sqrt(fan_in)
        w = jax.random.uniform(kw, (fan_in, fan_out), jnp.float32, -bound, bound)
        b = jax.random.uniform(kb, (1, fan_out), jnp.float32, -bound, bound)
        return w, b

    w1a, b1a = lin(k[0], k[1], state_size, hidden)
    w2a, b2a = lin(k[2], k[3], hidden, action_size)
    w1c, b1c = lin(k[4], k[5], state_size, hidden)
    return (w1a, b1a, w2a, b2a, w1c, b1c)


def reference_forward(x, params):
    """Plain-JAX reference (full f32 precision) for correctness checking."""
    w1a, b1a, w2a, b2a, w1c, b1c = params
    hi = jax.lax.Precision.HIGHEST
    h_a = jnp.maximum(jnp.dot(x, w1a, precision=hi) + b1a, 0.0)
    actor = jnp.dot(h_a, w2a, precision=hi) + b2a
    critic = jnp.maximum(jnp.dot(x, w1c, precision=hi) + b1c, 0.0)
    return actor, critic


if __name__ == "__main__":
    # Shapes consistent with the module: state_size=32, action_size=8,
    # hidden_layer_size=256 (fixed by __init__); small batch of 8 states.
    B, S, A = 8, 32, 8

    key = jax.random.PRNGKey(0)
    kx, kx2, kp = jax.random.split(key, 3)
    x = jax.random.normal(kx, (B, S), dtype=jnp.float32)
    params = init_params(kp, S, A)
    actor_ref, critic_ref = reference_forward(x, params)

    # 1) f32 path (matches the PyTorch module's numerics).
    fused_f32 = prepare_params(params)
    actor_out, critic_out = policy_gradient_forward(x, fused_f32)
    jax.block_until_ready((actor_out, critic_out))
    assert actor_out.shape == (B, A) and critic_out.shape == (B, HIDDEN)
    assert jnp.allclose(actor_out, actor_ref, atol=1e-4, rtol=1e-4)
    assert jnp.allclose(critic_out, critic_ref, atol=1e-4, rtol=1e-4)

    # 2) Multi-tile grid + ragged-batch padding path (B=40, 3 tiles of 16).
    B2 = 40
    x2 = jax.random.normal(kx2, (B2, S), dtype=jnp.float32)
    a2, c2 = policy_gradient_forward(x2, fused_f32, batch_tile=16)
    jax.block_until_ready((a2, c2))
    ar2, cr2 = reference_forward(x2, params)
    assert a2.shape == (B2, A) and c2.shape == (B2, HIDDEN)
    assert jnp.allclose(a2, ar2, atol=1e-4, rtol=1e-4)
    assert jnp.allclose(c2, cr2, atol=1e-4, rtol=1e-4)

    # 3) bf16 fast path (rollout inference: halved HBM traffic, f32 accumulate).
    fused_bf16 = prepare_params(params, compute_dtype=jnp.bfloat16)
    a3, c3 = policy_gradient_forward(x, fused_bf16, out_dtype=jnp.bfloat16)
    jax.block_until_ready((a3, c3))
    assert a3.dtype == jnp.bfloat16 and c3.dtype == jnp.bfloat16
    assert jnp.allclose(a3.astype(jnp.float32), actor_ref, atol=5e-2, rtol=5e-2)
    assert jnp.allclose(c3.astype(jnp.float32), critic_ref, atol=5e-2, rtol=5e-2)

    print("KERNEL_OK")
</pallas_src>

<mosaic_0001>
module attributes {stable_mosaic.version = 11 : i64} {
  func.func @_pg_forward_kernel(%arg0: i32, %arg1: memref<8x32xf32, #tpu.memory_space<vmem>>, %arg2: memref<32x512xf32, #tpu.memory_space<vmem>>, %arg3: memref<1x512xf32, #tpu.memory_space<vmem>>, %arg4: memref<256x8xf32, #tpu.memory_space<vmem>>, %arg5: memref<1x8xf32, #tpu.memory_space<vmem>>, %arg6: memref<8x8xf32, #tpu.memory_space<vmem>>, %arg7: memref<8x256xf32, #tpu.memory_space<vmem>>) attributes {dimension_semantics = [#tpu.dimension_semantics<parallel>], iteration_bounds = array<i64: 1>, scalar_prefetch = 0 : i64, scratch_operands = 0 : i64, tpu.core_type = #tpu.core_type<tc>, window_params = [{transform_indices = @transform_0, window_bounds = array<i64: 8, 32>}, {pipeline_mode = #tpu.pipeline_mode<synchronous>, transform_indices = @transform_1, window_bounds = array<i64: 32, 512>}, {pipeline_mode = #tpu.pipeline_mode<synchronous>, transform_indices = @transform_2, window_bounds = array<i64: 1, 512>}, {pipeline_mode = #tpu.pipeline_mode<synchronous>, transform_indices = @transform_3, window_bounds = array<i64: 256, 8>}, {pipeline_mode = #tpu.pipeline_mode<synchronous>, transform_indices = @transform_4, window_bounds = array<i64: 1, 8>}, {transform_indices = @transform_5, window_bounds = array<i64: 8, 8>}, {transform_indices = @transform_6, window_bounds = array<i64: 8, 256>}]} {
    %c0 = arith.constant 0 : index
    %c0_0 = arith.constant 0 : index
    %0 = vector.load %arg1[%c0, %c0_0] : memref<8x32xf32, #tpu.memory_space<vmem>>, vector<8x32xf32>
    %c0_1 = arith.constant 0 : index
    %c256 = arith.constant 256 : index
    %1 = vector.load %arg2[%c0_1, %c256] : memref<32x512xf32, #tpu.memory_space<vmem>>, vector<32x256xf32>
    %cst = arith.constant dense<0.000000e+00> : vector<8x256xf32>
    %2 = tpu.matmul %0, %1, %cst {dimension_numbers = #tpu.dot_dimension_numbers<[1], [0], [0], [1], [0, 0, 1, 1], [], []>} : vector<8x32xf32>, vector<32x256xf32>, vector<8x256xf32> -> vector<8x256xf32>
    %c0_2 = arith.constant 0 : index
    %c256_3 = arith.constant 256 : index
    %3 = vector.load %arg3[%c0_2, %c256_3] : memref<1x512xf32, #tpu.memory_space<vmem>>, vector<1x256xf32>
    %4 = vector.broadcast %3 : vector<1x256xf32> to vector<8x256xf32>
    %5 = arith.addf %2, %4 : vector<8x256xf32>
    %cst_4 = arith.constant 0.000000e+00 : f32
    %6 = vector.broadcast %cst_4 : f32 to vector<8x256xf32>
    %7 = arith.maximumf %5, %6 : vector<8x256xf32>
    %c0_5 = arith.constant 0 : index
    %c0_6 = arith.constant 0 : index
    %8 = vector.load %arg7[%c0_5, %c0_6] : memref<8x256xf32, #tpu.memory_space<vmem>>, vector<8x256xf32>
    tpu.vector_store %arg7[%c0_5, %c0_6], %7 {strides = array<i32>} : memref<8x256xf32, #tpu.memory_space<vmem>>, vector<8x256xf32>,
    %c0_7 = arith.constant 0 : index
    %c0_8 = arith.constant 0 : index
    %9 = vector.load %arg2[%c0_7, %c0_8] : memref<32x512xf32, #tpu.memory_space<vmem>>, vector<32x256xf32>
    %cst_9 = arith.constant dense<0.000000e+00> : vector<8x256xf32>
    %10 = tpu.matmul %0, %9, %cst_9 {dimension_numbers = #tpu.dot_dimension_numbers<[1], [0], [0], [1], [0, 0, 1, 1], [], []>} : vector<8x32xf32>, vector<32x256xf32>, vector<8x256xf32> -> vector<8x256xf32>
    %c0_10 = arith.constant 0 : index
    %c0_11 = arith.constant 0 : index
    %11 = vector.load %arg3[%c0_10, %c0_11] : memref<1x512xf32, #tpu.memory_space<vmem>>, vector<1x256xf32>
    %12 = vector.broadcast %11 : vector<1x256xf32> to vector<8x256xf32>
    %13 = arith.addf %10, %12 : vector<8x256xf32>
    %cst_12 = arith.constant 0.000000e+00 : f32
    %14 = vector.broadcast %cst_12 : f32 to vector<8x256xf32>
    %15 = arith.maximumf %13, %14 : vector<8x256xf32>
    %c0_13 = arith.constant 0 : index
    %c0_14 = arith.constant 0 : index
    %16 = vector.load %arg4[%c0_13, %c0_14] : memref<256x8xf32, #tpu.memory_space<vmem>>, vector<256x8xf32>
    %cst_15 = arith.constant dense<0.000000e+00> : vector<8x8xf32>
    %17 = tpu.matmul %15, %16, %cst_15 {dimension_numbers = #tpu.dot_dimension_numbers<[1], [0], [0], [1], [0, 0, 1, 1], [], []>} : vector<8x256xf32>, vector<256x8xf32>, vector<8x8xf32> -> vector<8x8xf32>
    %c0_16 = arith.constant 0 : index
    %c0_17 = arith.constant 0 : index
    %18 = vector.load %arg5[%c0_16, %c0_17] : memref<1x8xf32, #tpu.memory_space<vmem>>, vector<1x8xf32>
    %19 = vector.broadcast %18 : vector<1x8xf32> to vector<8x8xf32>
    %20 = arith.addf %17, %19 : vector<8x8xf32>
    %c0_18 = arith.constant 0 : index
    %c0_19 = arith.constant 0 : index
    %21 = vector.load %arg6[%c0_18, %c0_19] : memref<8x8xf32, #tpu.memory_space<vmem>>, vector<8x8xf32>
    tpu.vector_store %arg6[%c0_18, %c0_19], %20 {strides = array<i32>} : memref<8x8xf32, #tpu.memory_space<vmem>>, vector<8x8xf32>,
    return
  }
  func.func @transform_0(%arg0: i32) -> (i32, i32) {
    %c0_i32 = arith.constant 0 : i32
    %c0_i32_0 = arith.constant 0 : i32
    return %arg0, %c0_i32 : i32, i32
  }
  func.func @transform_1(%arg0: i32) -> (i32, i32) {
    %c0_i32 = arith.constant 0 : i32
    %c0_i32_0 = arith.constant 0 : i32
    %c0_i32_1 = arith.constant 0 : i32
    return %c0_i32, %c0_i32_0 : i32, i32
  }
  func.func @transform_2(%arg0: i32) -> (i32, i32) {
    %c0_i32 = arith.constant 0 : i32
    %c0_i32_0 = arith.constant 0 : i32
    %c0_i32_1 = arith.constant 0 : i32
    return %c0_i32, %c0_i32_0 : i32, i32
  }
  func.func @transform_3(%arg0: i32) -> (i32, i32) {
    %c0_i32 = arith.constant 0 : i32
    %c0_i32_0 = arith.constant 0 : i32
    %c0_i32_1 = arith.constant 0 : i32
    return %c0_i32, %c0_i32_0 : i32, i32
  }
  func.func @transform_4(%arg0: i32) -> (i32, i32) {
    %c0_i32 = arith.constant 0 : i32
    %c0_i32_0 = arith.constant 0 : i32
    %c0_i32_1 = arith.constant 0 : i32
    return %c0_i32, %c0_i32_0 : i32, i32
  }
  func.func @transform_5(%arg0: i32) -> (i32, i32) {
    %c0_i32 = arith.constant 0 : i32
    %c0_i32_0 = arith.constant 0 : i32
    return %arg0, %c0_i32 : i32, i32
  }
  func.func @transform_6(%arg0: i32) -> (i32, i32) {
    %c0_i32 = arith.constant 0 : i32
    %c0_i32_0 = arith.constant 0 : i32
    return %arg0, %c0_i32 : i32, i32
  }
}

</mosaic_0001>

<llo_original>
// kernel: tpu_custom_call.1
$region0: #{tpu_custom_call.1}
  #allocation0 [shape = 'u32[]', space=smem, size = 0x4, offset = 0x4, fixed_abs, tag = 'smem constant byte address 0x4 - core index']
  #allocation1 [shape = 'u32[144,128]{1,0:T(1,128)}', space=vmem, size = 0x12000, scoped, tag = 'internal scratch']
  %s0 = inlined_call_operand.vmem [shape: f32[8,32], index: 0, kind: input, shape index: {}]
  %s1 = inlined_call_operand.vmem [shape: f32[32,512], index: 1, kind: input, shape index: {}]
  %s2 = inlined_call_operand.vmem [shape: f32[1,512], index: 2, kind: input, shape index: {}]
  %s3 = inlined_call_operand.vmem [shape: f32[256,8], index: 3, kind: input, shape index: {}]
  %s4 = inlined_call_operand.vmem [shape: f32[1,8], index: 4, kind: input, shape index: {}]
  %s5 = inlined_call_operand.hbm [shape: f32[8,8], index: 5, kind: output, shape index: {0}]
  %s6 = inlined_call_operand.hbm [shape: f32[8,256], index: 6, kind: output, shape index: {1}]
  %7 = xla_tuple %s5, %s6
  %s8 = sld [smem:[#allocation0]]
  $region38: #{tpu_custom_call.1} parent=0
    _
  %s10 = ssub.s32 1, %s8
  %s11 = scalar_select 0, %s10, %s8
  $region1: #{tpu_custom_call.1} parent=0
    #allocation2 [shape = 'u8[4096]{0}', space=vmem, size = 0x1000, scoped, tag = 'output window, operand 0, single buffered']
    #allocation3 [shape = 's32[1]{0}', space=sflag, size = 0x4, scoped, tag = 'scoped memory for tpu_custom_call.1']
    #allocation4 [shape = 'u8[8192]{0}', space=vmem, size = 0x2000, scoped, tag = 'output window, operand 1, single buffered']
    #allocation5 [shape = 's32[1]{0}', space=sflag, size = 0x4, scoped, tag = 'scoped memory for tpu_custom_call.1']
    %12 = vsyncpa [#allocation3], 0
    %13 = vsyncpa [#allocation5], 0
    // Predicated region
    $region2: #{tpu_custom_call.1} parent=1 // pred_check
      _
    $region3: #{tpu_custom_call.1} parent=1 // pred_check_branch
      %15 = sbr.rel (0) target = $region5
    $region4: #{tpu_custom_call.1} parent=1 // pred_region
      _
    $region5: #{tpu_custom_call.1} parent=1 // pred_fallthru
      _
    // Predicated region
    $region6: #{tpu_custom_call.1} parent=1 // pred_check
      _
    $region7: #{tpu_custom_call.1} parent=1 // pred_check_branch
      %17 = sbr.rel (0) target = $region9
    $region8: #{tpu_custom_call.1} parent=1 // pred_region
      _
    $region9: #{tpu_custom_call.1} parent=1 // pred_fallthru
      _
    // Predicated region
    $region10: #{tpu_custom_call.1} parent=1 // pred_check
      _
    $region11: #{tpu_custom_call.1} parent=1 // pred_check_branch
      %19 = sbr.rel (0) target = $region13
    $region12: #{tpu_custom_call.1} parent=1 // pred_region
      _
    $region13: #{tpu_custom_call.1} parent=1 // pred_fallthru
      _
    // Predicated region
    $region14: #{tpu_custom_call.1} parent=1 // pred_check
      _
    $region15: #{tpu_custom_call.1} parent=1 // pred_check_branch
      %21 = sbr.rel (0) target = $region17
    $region16: #{tpu_custom_call.1} parent=1 // pred_region
      _
    $region17: #{tpu_custom_call.1} parent=1 // pred_fallthru
      _
    // Predicated region
    $region18: #{tpu_custom_call.1} parent=1 // pred_check
      _
    $region19: #{tpu_custom_call.1} parent=1 // pred_check_branch
      %23 = sbr.rel (0) target = $region21
    $region20: #{tpu_custom_call.1} parent=1 // pred_region
      _
    $region21: #{tpu_custom_call.1} parent=1 // pred_fallthru
      _
    %v24 = vld [vmem:[%s0] sm:$0xff]
    %v25 = vld [vmem:[%s1 + $0x10] sm:$0xff]
    %v26 = vld [vmem:[%s1 + $0x18] sm:$0xff]
    %v27 = vld [vmem:[%s1 + $0x30] sm:$0xff]
    %v28 = vld [vmem:[%s1 + $0x38] sm:$0xff]
    %v29 = vld [vmem:[%s1 + $0x50] sm:$0xff]
    %v30 = vld [vmem:[%s1 + $0x58] sm:$0xff]
    %v31 = vld [vmem:[%s1 + $0x70] sm:$0xff]
    %v32 = vld [vmem:[%s1 + $0x78] sm:$0xff]
    %v33 = vld [vmem:[%s2 + $0x2] sm:$0x3]
    %v35 = vlaneseq
    %v36 = vshrl.u32 %v35, 7
    %v37 = vsub.s32 0, %v36
    %v38 = vrot.slane %v33, %v37
    %v39 = vlaneseq
    %v40 = vshrl.u32 %v39, 7
    %v41 = vsub.s32 1, %v40
    %v42 = vrot.slane %v33, %v41
    %vm45 = vcmask 261120
    %v47 = vsel %vm45, %v24, 0
    %49 = vmatprep.subr.mxu0 %v26
    %50 = vmatpush1.msra.mxu0 %v25
    %51 = vmatprep.subr.mxu0 %v28
    %52 = vmatpush1.msra.mxu0 %v27
    %53 = vmatprep.subr.mxu0 %v30
    %54 = vmatpush1.msra.mxu0 %v29
    %55 = vmatprep.subr.mxu0 %v32
    %56 = vmatpush1.msra.mxu0 %v31
    %57 = vmatprep.subr.mxu0 0.0
    %58 = vmatpush1.msra.mxu0 0.0
    %59 = vmatprep.subr.mxu0 0.0
    %60 = vmatpush1.msra.mxu0 0.0
    %61 = vmatprep.subr.mxu0 0.0
    %62 = vmatpush1.msra.mxu0 0.0
    %63 = vmatprep.subr.mxu0 0.0
    %64 = vmatpush1.msra.mxu0 0.0
    %65 = vmatprep.subr.mxu0 0.0
    %66 = vmatpush1.msra.mxu0 0.0
    %67 = vmatprep.subr.mxu0 0.0
    %68 = vmatpush1.msra.mxu0 0.0
    %69 = vmatprep.subr.mxu0 0.0
    %70 = vmatpush1.msra.mxu0 0.0
    %71 = vmatprep.subr.mxu0 0.0
    %72 = vmatpush1.msra.mxu0 0.0
    %73 = vmatprep.subr.mxu0 0.0
    %74 = vmatpush1.msra.mxu0 0.0
    %75 = vmatprep.subr.mxu0 0.0
    %76 = vmatpush1.msra.mxu0 0.0
    %77 = vmatprep.subr.mxu0 0.0
    %78 = vmatpush1.msra.mxu0 0.0
    %79 = vmatprep.subr.mxu0 0.0
    %80 = vmatpush1.msra.mxu0 0.0
    %81 = vmatprep.subr.mxu0 0.0
    %82 = vmatpush1.msra.mxu0 0.0
    %83 = vmatprep.subr.mxu0 0.0
    %84 = vmatpush1.msra.mxu0 0.0
    %85 = vmatprep.subr.mxu0 0.0
    %86 = vmatpush1.msra.mxu0 0.0
    %87 = vmatprep.subr.mxu0 0.0
    %88 = vmatpush1.msra.mxu0 0.0
    %89 = vmatprep.subr.mxu0 0.0
    %90 = vmatpush1.msra.mxu0 0.0
    %91 = vmatprep.subr.mxu0 0.0
    %92 = vmatpush1.msra.mxu0 0.0
    %93 = vmatprep.subr.mxu0 0.0
    %94 = vmatpush1.msra.mxu0 0.0
    %95 = vmatprep.subr.mxu0 0.0
    %96 = vmatpush1.msra.mxu0 0.0
    %97 = vmatprep.subr.mxu0 0.0
    %98 = vmatpush1.msra.mxu0 0.0
    %99 = vmatprep.subr.mxu0 0.0
    %100 = vmatpush1.msra.mxu0 0.0
    %101 = vmatprep.subr.mxu0 0.0
    %102 = vmatpush1.msra.mxu0 0.0
    %103 = vmatprep.subr.mxu0 0.0
    %104 = vmatpush1.msra.mxu0 0.0
    %105 = vmatprep.subr.mxu0 0.0
    %106 = vmatpush1.msra.mxu0 0.0
    %107 = vmatprep.subr.mxu0 0.0
    %108 = vmatpush1.msra.mxu0 0.0
    %109 = vmatprep.subr.mxu0 0.0
    %110 = vmatpush1.msra.mxu0 0.0
    %111 = vmatprep.subr.mxu0 0.0
    %112 = vmatpush1.msra.mxu0 0.0
    %113 = vmatprep.mubr.f32.mxu0 0.0
    %114 = vmatmul.mubr.f32.gmra.mrb[0].mxu0 %v47
    %v115 = vpop.f32.mrb[0].mxu0
    %v116 = vadd.f32 %v38, %v115
    %v117 = vpop.f32.mrb[0].mxu0
    %v118 = vadd.f32 %v42, %v117
    %119 = vdwg.mxu0
    %v120 = vmax.f32 %v116, 0.0
    %v121 = vmax.f32 %v118, 0.0
    %122 = vst [vmem:[#allocation4] sm:$0xff] %v120
    %123 = vst [vmem:[#allocation4 + $0x8] sm:$0xff] %v121
    %v124 = vld [vmem:[%s1] sm:$0xff]
    %v125 = vld [vmem:[%s1 + $0x8] sm:$0xff]
    %v126 = vld [vmem:[%s1 + $0x20] sm:$0xff]
    %v127 = vld [vmem:[%s1 + $0x28] sm:$0xff]
    %v128 = vld [vmem:[%s1 + $0x40] sm:$0xff]
    %v129 = vld [vmem:[%s1 + $0x48] sm:$0xff]
    %v130 = vld [vmem:[%s1 + $0x60] sm:$0xff]
    %v131 = vld [vmem:[%s1 + $0x68] sm:$0xff]
    %v132 = vld [vmem:[%s2] sm:$0x3]
    %v134 = vlaneseq
    %v135 = vshrl.u32 %v134, 7
    %v136 = vsub.s32 0, %v135
    %v137 = vrot.slane %v132, %v136
    %v138 = vlaneseq
    %v139 = vshrl.u32 %v138, 7
    %v140 = vsub.s32 1, %v139
    %v141 = vrot.slane %v132, %v140
    %144 = vmatprep.subr.mxu0 %v125
    %145 = vmatpush1.msra.mxu0 %v124
    %146 = vmatprep.subr.mxu0 %v127
    %147 = vmatpush1.msra.mxu0 %v126
    %148 = vmatprep.subr.mxu0 %v129
    %149 = vmatpush1.msra.mxu0 %v128
    %150 = vmatprep.subr.mxu0 %v131
    %151 = vmatpush1.msra.mxu0 %v130
    %152 = vmatprep.subr.mxu0 0.0
    %153 = vmatpush1.msra.mxu0 0.0
    %154 = vmatprep.subr.mxu0 0.0
    %155 = vmatpush1.msra.mxu0 0.0
    %156 = vmatprep.subr.mxu0 0.0
    %157 = vmatpush1.msra.mxu0 0.0
    %158 = vmatprep.subr.mxu0 0.0
    %159 = vmatpush1.msra.mxu0 0.0
    %160 = vmatprep.subr.mxu0 0.0
    %161 = vmatpush1.msra.mxu0 0.0
    %162 = vmatprep.subr.mxu0 0.0
    %163 = vmatpush1.msra.mxu0 0.0
    %164 = vmatprep.subr.mxu0 0.0
    %165 = vmatpush1.msra.mxu0 0.0
    %166 = vmatprep.subr.mxu0 0.0
    %167 = vmatpush1.msra.mxu0 0.0
    %168 = vmatprep.subr.mxu0 0.0
    %169 = vmatpush1.msra.mxu0 0.0
    %170 = vmatprep.subr.mxu0 0.0
    %171 = vmatpush1.msra.mxu0 0.0
    %172 = vmatprep.subr.mxu0 0.0
    %173 = vmatpush1.msra.mxu0 0.0
    %174 = vmatprep.subr.mxu0 0.0
    %175 = vmatpush1.msra.mxu0 0.0
    %176 = vmatprep.subr.mxu0 0.0
    %177 = vmatpush1.msra.mxu0 0.0
    %178 = vmatprep.subr.mxu0 0.0
    %179 = vmatpush1.msra.mxu0 0.0
    %180 = vmatprep.subr.mxu0 0.0
    %181 = vmatpush1.msra.mxu0 0.0
    %182 = vmatprep.subr.mxu0 0.0
    %183 = vmatpush1.msra.mxu0 0.0
    %184 = vmatprep.subr.mxu0 0.0
    %185 = vmatpush1.msra.mxu0 0.0
    %186 = vmatprep.subr.mxu0 0.0
    %187 = vmatpush1.msra.mxu0 0.0
    %188 = vmatprep.subr.mxu0 0.0
    %189 = vmatpush1.msra.mxu0 0.0
    %190 = vmatprep.subr.mxu0 0.0
    %191 = vmatpush1.msra.mxu0 0.0
    %192 = vmatprep.subr.mxu0 0.0
    %193 = vmatpush1.msra.mxu0 0.0
    %194 = vmatprep.subr.mxu0 0.0
    %195 = vmatpush1.msra.mxu0 0.0
    %196 = vmatprep.subr.mxu0 0.0
    %197 = vmatpush1.msra.mxu0 0.0
    %198 = vmatprep.subr.mxu0 0.0
    %199 = vmatpush1.msra.mxu0 0.0
    %200 = vmatprep.subr.mxu0 0.0
    %201 = vmatpush1.msra.mxu0 0.0
    %202 = vmatprep.subr.mxu0 0.0
    %203 = vmatpush1.msra.mxu0 0.0
    %204 = vmatprep.subr.mxu0 0.0
    %205 = vmatpush1.msra.mxu0 0.0
    %206 = vmatprep.subr.mxu0 0.0
    %207 = vmatpush1.msra.mxu0 0.0
    %208 = vmatprep.mubr.f32.mxu0 0.0
    %209 = vmatmul.mubr.f32.gmra.mrb[0].mxu0 %v47
    %v210 = vpop.f32.mrb[0].mxu0
    %v211 = vadd.f32 %v137, %v210
    %v212 = vpop.f32.mrb[0].mxu0
    %v213 = vadd.f32 %v141, %v212
    %214 = vdwg.mxu0
    %v215 = vmax.f32 %v211, 0.0
    %v216 = vmax.f32 %v213, 0.0
    %v217 = vld [vmem:[%s3] sm:$0xff]
    %v218 = vld [vmem:[%s3 + $0x8] sm:$0xff]
    %v219 = vld [vmem:[%s3 + $0x10] sm:$0xff]
    %v220 = vld [vmem:[%s3 + $0x18] sm:$0xff]
    %v221 = vld [vmem:[%s3 + $0x20] sm:$0xff]
    %v222 = vld [vmem:[%s3 + $0x28] sm:$0xff]
    %v223 = vld [vmem:[%s3 + $0x30] sm:$0xff]
    %v224 = vld [vmem:[%s3 + $0x38] sm:$0xff]
    %v225 = vld [vmem:[%s3 + $0x40] sm:$0xff]
    %v226 = vld [vmem:[%s3 + $0x48] sm:$0xff]
    %v227 = vld [vmem:[%s3 + $0x50] sm:$0xff]
    %v228 = vld [vmem:[%s3 + $0x58] sm:$0xff]
    %v229 = vld [vmem:[%s3 + $0x60] sm:$0xff]
    %v230 = vld [vmem:[%s3 + $0x68] sm:$0xff]
    %v231 = vld [vmem:[%s3 + $0x70] sm:$0xff]
    %v232 = vld [vmem:[%s3 + $0x78] sm:$0xff]
    %v233 = vld [vmem:[%s3 + $0x80] sm:$0xff]
    %v234 = vld [vmem:[%s3 + $0x88] sm:$0xff]
    %v235 = vld [vmem:[%s3 + $0x90] sm:$0xff]
    %v236 = vld [vmem:[%s3 + $0x98] sm:$0xff]
    %v237 = vld [vmem:[%s3 + $0xa0] sm:$0xff]
    %v238 = vld [vmem:[%s3 + $0xa8] sm:$0xff]
    %v239 = vld [vmem:[%s3 + $0xb0] sm:$0xff]
    %v240 = vld [vmem:[%s3 + $0xb8] sm:$0xff]
    %v241 = vld [vmem:[%s3 + $0xc0] sm:$0xff]
    %v242 = vld [vmem:[%s3 + $0xc8] sm:$0xff]
    %v243 = vld [vmem:[%s3 + $0xd0] sm:$0xff]
    %v244 = vld [vmem:[%s3 + $0xd8] sm:$0xff]
    %v245 = vld [vmem:[%s3 + $0xe0] sm:$0xff]
    %v246 = vld [vmem:[%s3 + $0xe8] sm:$0xff]
    %v247 = vld [vmem:[%s3 + $0xf0] sm:$0xff]
    %v248 = vld [vmem:[%s3 + $0xf8] sm:$0xff]
    %v249 = vld [vmem:[%s4] sm:$0x1]
    %v251 = vlaneseq
    %v252 = vshrl.u32 %v251, 7
    %v253 = vsub.s32 0, %v252
    %v254 = vrot.slane %v249, %v253
    %256 = vmatprep.subr.mxu0 0.0
    %257 = vmatpush1.msra.mxu0 %v217
    %258 = vmatprep.subr.mxu0 0.0
    %259 = vmatpush1.msra.mxu0 %v218
    %260 = vmatprep.subr.mxu0 0.0
    %261 = vmatpush1.msra.mxu0 %v219
    %262 = vmatprep.subr.mxu0 0.0
    %263 = vmatpush1.msra.mxu0 %v220
    %264 = vmatprep.subr.mxu0 0.0
    %265 = vmatpush1.msra.mxu0 %v221
    %266 = vmatprep.subr.mxu0 0.0
    %267 = vmatpush1.msra.mxu0 %v222
    %268 = vmatprep.subr.mxu0 0.0
    %269 = vmatpush1.msra.mxu0 %v223
    %270 = vmatprep.subr.mxu0 0.0
    %271 = vmatpush1.msra.mxu0 %v224
    %272 = vmatprep.subr.mxu0 0.0
    %273 = vmatpush1.msra.mxu0 %v225
    %274 = vmatprep.subr.mxu0 0.0
    %275 = vmatpush1.msra.mxu0 %v226
    %276 = vmatprep.subr.mxu0 0.0
    %277 = vmatpush1.msra.mxu0 %v227
    %278 = vmatprep.subr.mxu0 0.0
    %279 = vmatpush1.msra.mxu0 %v228
    %280 = vmatprep.subr.mxu0 0.0
    %281 = vmatpush1.msra.mxu0 %v229
    %282 = vmatprep.subr.mxu0 0.0
    %283 = vmatpush1.msra.mxu0 %v230
    %284 = vmatprep.subr.mxu0 0.0
    %285 = vmatpush1.msra.mxu0 %v231
    %286 = vmatprep.subr.mxu0 0.0
    %287 = vmatpush1.msra.mxu0 %v232
    %288 = vmatprep.subr.mxu0 0.0
    %289 = vmatpush1.msra.mxu0 %v233
    %290 = vmatprep.subr.mxu0 0.0
    %291 = vmatpush1.msra.mxu0 %v234
    %292 = vmatprep.subr.mxu0 0.0
    %293 = vmatpush1.msra.mxu0 %v235
    %294 = vmatprep.subr.mxu0 0.0
    %295 = vmatpush1.msra.mxu0 %v236
    %296 = vmatprep.subr.mxu0 0.0
    %297 = vmatpush1.msra.mxu0 %v237
    %298 = vmatprep.subr.mxu0 0.0
    %299 = vmatpush1.msra.mxu0 %v238
    %300 = vmatprep.subr.mxu0 0.0
    %301 = vmatpush1.msra.mxu0 %v239
    %302 = vmatprep.subr.mxu0 0.0
    %303 = vmatpush1.msra.mxu0 %v240
    %304 = vmatprep.subr.mxu0 0.0
    %305 = vmatpush1.msra.mxu0 %v241
    %306 = vmatprep.subr.mxu0 0.0
    %307 = vmatpush1.msra.mxu0 %v242
    %308 = vmatprep.subr.mxu0 0.0
    %309 = vmatpush1.msra.mxu0 %v243
    %310 = vmatprep.subr.mxu0 0.0
    %311 = vmatpush1.msra.mxu0 %v244
    %312 = vmatprep.subr.mxu0 0.0
    %313 = vmatpush1.msra.mxu0 %v245
    %314 = vmatprep.subr.mxu0 0.0
    %315 = vmatpush1.msra.mxu0 %v246
    %316 = vmatprep.subr.mxu0 0.0
    %317 = vmatpush1.msra.mxu0 %v247
    %318 = vmatprep.subr.mxu0 0.0
    %319 = vmatpush1.msra.mxu0 %v248
    %320 = vmatprep.mubr.f32.mxu0 %v216
    %321 = vmatmul.mubr.f32.gmra.mrb[0].mxu0 %v215
    %v322 = vpop.f32.mrb[0].mxu0
    %v323 = vadd.f32 %v254, %v322
    %v324 = vpop.f32.mrb[0].mxu0
    %325 = vdwg.mxu0
    %vm326 = vcmask 64512
    %327 = vst.msk [vmem:[#allocation2] sm:$0xff] %vm326, %v323
    // Predicated region
    $region22: #{tpu_custom_call.1} parent=1 // pred_check
      _
    $region23: #{tpu_custom_call.1} parent=1 // pred_check_branch
      %329 = sbr.rel (0) target = $region25
    $region24: #{tpu_custom_call.1} parent=1 // pred_region
      %s331 = ssub.s32 128, 128
      %332 = vsyncadd [#allocation3], %s331
      %s334 = sshll.u32 [#allocation2], 4
      %s335 = int_to_ptr.vmem [resolvable:$true] %s334
      %337 = dma.vmem_to_hbm [thread:$0]  %s335, 128, %s5, [#allocation3]
    $region25: #{tpu_custom_call.1} parent=1 // pred_fallthru
      _
    // Predicated region
    $region26: #{tpu_custom_call.1} parent=1 // pred_check
      _
    $region27: #{tpu_custom_call.1} parent=1 // pred_check_branch
      %339 = sbr.rel (0) target = $region29
    $region28: #{tpu_custom_call.1} parent=1 // pred_region
      %s341 = ssub.s32 256, 256
      %342 = vsyncadd [#allocation5], %s341
      %s344 = sshll.u32 [#allocation4], 4
      %s345 = int_to_ptr.vmem [resolvable:$true] %s344
      %347 = dma.vmem_to_hbm [thread:$0]  %s345, 256, %s6, [#allocation5]
    $region29: #{tpu_custom_call.1} parent=1 // pred_fallthru
      _
    // Predicated region
    $region30: #{tpu_custom_call.1} parent=1 // pred_check
      _
    $region31: #{tpu_custom_call.1} parent=1 // pred_check_branch
      %349 = sbr.rel (0) target = $region33
    $region32: #{tpu_custom_call.1} parent=1 // pred_region
      %350 = dma.done [#allocation3], 128
    $region33: #{tpu_custom_call.1} parent=1 // pred_fallthru
      _
    // Predicated region
    $region34: #{tpu_custom_call.1} parent=1 // pred_check
      _
    $region35: #{tpu_custom_call.1} parent=1 // pred_check_branch
      %352 = sbr.rel (0) target = $region37
    $region36: #{tpu_custom_call.1} parent=1 // pred_region
      %353 = dma.done [#allocation5], 256
    $region37: #{tpu_custom_call.1} parent=1 // pred_fallthru
      _
    %354 = vsyncpa [#allocation3], 1
    %355 = vsyncpa [#allocation5], 1

</llo_original>
